<compile_context>
chip_gen: v7x
topology: tpu7x:2x2x1
jax: 0.10.0
libtpu: 0.0.40
codegen_flags: <defaults>
</compile_context>

<pallas_src>
import math
import functools

import jax
import jax.numpy as jnp
from jax.experimental import pallas as pl
from jax.experimental.pallas import tpu as pltpu

F32 = jnp.float32
BF16 = jnp.bfloat16


def _mish(x):
    # x * tanh(softplus(x))
    return x * jnp.tanh(jnp.logaddexp(x, 0.0))


# --------------------------------------------------------------------------
# Small dense kernel: diffusion-step encoder + the single stacked FiLM matmul
# --------------------------------------------------------------------------
def _linear_kernel(x_ref, w_ref, b_ref, o_ref, *, mish_in, mish_out):
    x = x_ref[...].astype(F32)
    if mish_in:
        x = _mish(x)
    y = jnp.dot(x, w_ref[...], preferred_element_type=F32) + b_ref[...]
    if mish_out:
        y = _mish(y)
    o_ref[...] = y


def pallas_linear(x, w, b, *, mish_in=False, mish_out=False):
    """y = (mish?)(x) @ w + b (optionally mish on output). Rows here are only B,
    so the whole problem fits one VMEM tile; no grid needed."""
    n = x.shape[0]
    dout = w.shape[1]
    return pl.pallas_call(
        functools.partial(_linear_kernel, mish_in=mish_in, mish_out=mish_out),
        out_shape=jax.ShapeDtypeStruct((n, dout), F32),
    )(x.astype(F32), w.astype(F32), b.reshape(1, dout).astype(F32))


# --------------------------------------------------------------------------
# Fused Conv1dBlock kernel: Conv1d('same') + GroupNorm + Mish
#   + optional FiLM bias add          (block0 of a residual block)
#   + optional residual add           (block1; identity or fused 1x1 projection)
#   + optional trailing 1x1 conv      (final_conv projection)
# --------------------------------------------------------------------------
def _conv_block_kernel(*refs, K, T, bb, eps, has_cond, res_mode, has_post):
    it = iter(refs)
    x_ref = next(it)        # (bb, T + 2*pad, Cin)   f32 (padded)
    w_ref = next(it)        # (K, Cin, Cout)         bf16
    b_ref = next(it)        # (1, Cout)              f32
    g_ref = next(it)        # (1, Cout)              f32 GN gamma
    beta_ref = next(it)     # (1, Cout)              f32 GN beta
    scat_ref = next(it)     # (Cout, G)  channel -> group mean scatter (1/Cg)
    gath_ref = next(it)     # (G, Cout)  group -> channel broadcast
    cond_ref = next(it) if has_cond else None          # (bb, Cout)
    rx_ref = rw_ref = rb_ref = None
    if res_mode != "none":
        rx_ref = next(it)                               # (bb, T, Crx)
        if res_mode == "proj":
            rw_ref = next(it)                           # (Crx, Cout) bf16
            rb_ref = next(it)                           # (1, Cout)
    pw_ref = pb_ref = None
    if has_post:
        pw_ref = next(it)                               # (Cout, Dout) bf16
        pb_ref = next(it)                               # (1, Dout)
    o_ref = next(it)

    cin = x_ref.shape[-1]
    cout = w_ref.shape[-1]

    x = x_ref[...]                                      # f32 padded input
    # --- Conv1d: K tap matmuls with B*T folded into the MXU M dimension -----
    acc = None
    for k in range(K):
        xk = x[:, k:k + T, :].reshape(bb * T, cin).astype(BF16)
        part = jnp.dot(xk, w_ref[k], preferred_element_type=F32)
        acc = part if acc is None else acc + part
    acc = acc.reshape(bb, T, cout) + b_ref[...]

    # --- GroupNorm: stats per (batch, group) over time x group-channels -----
    inv_t = 1.0 / T
    s1 = jnp.sum(acc, axis=1) * inv_t                   # (bb, Cout) E[x] per chan
    s2 = jnp.sum(acc * acc, axis=1) * inv_t             # (bb, Cout) E[x^2] per chan
    mu_g = jnp.dot(s1, scat_ref[...], preferred_element_type=F32)   # (bb, G)
    m2_g = jnp.dot(s2, scat_ref[...], preferred_element_type=F32)
    mu = jnp.dot(mu_g, gath_ref[...], preferred_element_type=F32)   # (bb, Cout)
    m2 = jnp.dot(m2_g, gath_ref[...], preferred_element_type=F32)
    var = jnp.maximum(m2 - mu * mu, 0.0)
    y = (acc - mu[:, None, :]) * jax.lax.rsqrt(var[:, None, :] + eps)
    y = y * g_ref[...] + beta_ref[...]
    y = _mish(y)

    # --- fused FiLM conditioning bias (broadcast over time) -----------------
    if has_cond:
        y = y + cond_ref[...][:, None, :]

    # --- fused residual add (identity or 1x1-projected) ---------------------
    if res_mode == "identity":
        y = y + rx_ref[...]
    elif res_mode == "proj":
        crx = rx_ref.shape[-1]
        rx = rx_ref[...].reshape(bb * T, crx).astype(BF16)
        r = jnp.dot(rx, rw_ref[...], preferred_element_type=F32) + rb_ref[...]
        y = y + r.reshape(bb, T, cout)

    # --- fused trailing 1x1 conv (final projection) -------------------------
    if has_post:
        dpost = pw_ref.shape[-1]
        y2 = y.reshape(bb * T, cout).astype(BF16)
        y = (jnp.dot(y2, pw_ref[...], preferred_element_type=F32)
             + pb_ref[...]).reshape(bb, T, dpost)

    o_ref[...] = y


def conv_block(x, blk, *, cond_add=None, res_x=None, res_w=None, res_b=None,
               post_w=None, post_b=None, eps=1e-5):
    B, T, Cin = x.shape
    w = blk["w"]
    K, _, Cout = w.shape
    G = blk["gath"].shape[0]
    pad = K // 2
    bb = B                      # whole batch in one grid step -> M = B*T
    nb = B // bb

    # TODO(synk): 'same' padding still materialized by XLA glue (small); could be
    # folded into the kernel with an in-VMEM concat at production sizes.
    x_pad = jnp.pad(x.astype(F32), ((0, 0), (pad, pad), (0, 0)))
    Tp = T + 2 * pad

    has_cond = cond_add is not None
    res_mode = "none"
    if res_x is not None:
        res_mode = "proj" if res_w is not None else "identity"
    has_post = post_w is not None
    Dout = post_w.shape[-1] if has_post else Cout

    inputs = [x_pad, w, blk["b"].reshape(1, Cout), blk["g"].reshape(1, Cout),
              blk["beta"].reshape(1, Cout), blk["scat"], blk["gath"]]
    in_specs = [
        pl.BlockSpec((bb, Tp, Cin), lambda i: (i, 0, 0)),
        pl.BlockSpec((K, Cin, Cout), lambda i: (0, 0, 0)),
        pl.BlockSpec((1, Cout), lambda i: (0, 0)),
        pl.BlockSpec((1, Cout), lambda i: (0, 0)),
        pl.BlockSpec((1, Cout), lambda i: (0, 0)),
        pl.BlockSpec((Cout, G), lambda i: (0, 0)),
        pl.BlockSpec((G, Cout), lambda i: (0, 0)),
    ]
    if has_cond:
        inputs.append(cond_add.astype(F32))
        in_specs.append(pl.BlockSpec((bb, Cout), lambda i: (i, 0)))
    if res_mode != "none":
        Crx = res_x.shape[-1]
        inputs.append(res_x.astype(F32))
        in_specs.append(pl.BlockSpec((bb, T, Crx), lambda i: (i, 0, 0)))
        if res_mode == "proj":
            inputs += [res_w, res_b.reshape(1, Cout)]
            in_specs += [pl.BlockSpec((Crx, Cout), lambda i: (0, 0)),
                         pl.BlockSpec((1, Cout), lambda i: (0, 0))]
    if has_post:
        inputs += [post_w, post_b.reshape(1, Dout)]
        in_specs += [pl.BlockSpec((Cout, Dout), lambda i: (0, 0)),
                     pl.BlockSpec((1, Dout), lambda i: (0, 0))]

    kern = functools.partial(_conv_block_kernel, K=K, T=T, bb=bb, eps=eps,
                             has_cond=has_cond, res_mode=res_mode,
                             has_post=has_post)
    return pl.pallas_call(
        kern,
        grid=(nb,),
        in_specs=in_specs,
        out_specs=pl.BlockSpec((bb, T, Dout), lambda i: (i, 0, 0)),
        out_shape=jax.ShapeDtypeStruct((B, T, Dout), F32),
        compiler_params=pltpu.CompilerParams(dimension_semantics=("parallel",)),
    )(*inputs)


# --------------------------------------------------------------------------
# Downsample1d: Conv1d(C, C, 3, stride=2, padding=1); only even outputs computed
# --------------------------------------------------------------------------
def _down_kernel(xe_ref, xo_ref, w_ref, b_ref, o_ref, *, Th, bb):
    cin = xo_ref.shape[-1]
    cout = w_ref.shape[-1]
    xe = xe_ref[...]                                   # (bb, Th+1, C): x_pad even taps
    xo = xo_ref[...]                                   # (bb, Th,   C): x_pad odd taps
    a = jnp.dot(xe[:, :Th, :].reshape(bb * Th, cin).astype(BF16), w_ref[0],
                preferred_element_type=F32)
    a = a + jnp.dot(xo.reshape(bb * Th, cin).astype(BF16), w_ref[1],
                    preferred_element_type=F32)
    a = a + jnp.dot(xe[:, 1:, :].reshape(bb * Th, cin).astype(BF16), w_ref[2],
                    preferred_element_type=F32)
    o_ref[...] = (a + b_ref[...]).reshape(bb, Th, cout)


def downsample1d(p, x):
    B, T, C = x.shape
    Th = T // 2
    # y[t] = x[2t-1] w0 + x[2t] w1 + x[2t+1] w2  (x[-1] = 0)
    xo = x[:, 0::2, :].astype(F32)                                     # (B, Th, C)
    xe = jnp.pad(x[:, 1::2, :].astype(F32), ((0, 0), (1, 0), (0, 0)))  # (B, Th+1, C)
    bb = B
    nb = B // bb
    return pl.pallas_call(
        functools.partial(_down_kernel, Th=Th, bb=bb),
        grid=(nb,),
        in_specs=[pl.BlockSpec((bb, Th + 1, C), lambda i: (i, 0, 0)),
                  pl.BlockSpec((bb, Th, C), lambda i: (i, 0, 0)),
                  pl.BlockSpec((3, C, C), lambda i: (0, 0, 0)),
                  pl.BlockSpec((1, C), lambda i: (0, 0))],
        out_specs=pl.BlockSpec((bb, Th, C), lambda i: (i, 0, 0)),
        out_shape=jax.ShapeDtypeStruct((B, Th, C), F32),
        compiler_params=pltpu.CompilerParams(dimension_semantics=("parallel",)),
    )(xe, xo, p["w"], p["b"].reshape(1, C))


# --------------------------------------------------------------------------
# Upsample1d: ConvTranspose1d(C, C, 4, stride=2, padding=1) via even/odd phases
#   y[2s]   = x[s] w1 + x[s-1] w3
#   y[2s+1] = x[s] w2 + x[s+1] w0        (weights stored (K, Cin, Cout))
# --------------------------------------------------------------------------
def _up_kernel(x_ref, w_ref, b_ref, oe_ref, oo_ref, *, T, bb):
    c = x_ref.shape[-1]
    xp = x_ref[...]                                    # (bb, T+2, C), zero-padded
    xc = xp[:, 1:T + 1, :].reshape(bb * T, c).astype(BF16)
    xm = xp[:, 0:T, :].reshape(bb * T, c).astype(BF16)
    xpn = xp[:, 2:T + 2, :].reshape(bb * T, c).astype(BF16)
    ye = (jnp.dot(xc, w_ref[1], preferred_element_type=F32)
          + jnp.dot(xm, w_ref[3], preferred_element_type=F32) + b_ref[...])
    yo = (jnp.dot(xc, w_ref[2], preferred_element_type=F32)
          + jnp.dot(xpn, w_ref[0], preferred_element_type=F32) + b_ref[...])
    oe_ref[...] = ye.reshape(bb, T, c)
    oo_ref[...] = yo.reshape(bb, T, c)


def upsample1d(p, x):
    B, T, C = x.shape
    xp = jnp.pad(x.astype(F32), ((0, 0), (1, 1), (0, 0)))
    bb = B
    nb = B // bb
    ye, yo = pl.pallas_call(
        functools.partial(_up_kernel, T=T, bb=bb),
        grid=(nb,),
        in_specs=[pl.BlockSpec((bb, T + 2, C), lambda i: (i, 0, 0)),
                  pl.BlockSpec((4, C, C), lambda i: (0, 0, 0)),
                  pl.BlockSpec((1, C), lambda i: (0, 0))],
        out_specs=(pl.BlockSpec((bb, T, C), lambda i: (i, 0, 0)),
                   pl.BlockSpec((bb, T, C), lambda i: (i, 0, 0))),
        out_shape=(jax.ShapeDtypeStruct((B, T, C), F32),
                   jax.ShapeDtypeStruct((B, T, C), F32)),
        compiler_params=pltpu.CompilerParams(dimension_semantics=("parallel",)),
    )(xp, p["w"], p["b"].reshape(1, C))
    # interleave even/odd phases -> (B, 2T, C)   (cheap XLA glue)
    return jnp.stack([ye, yo], axis=2).reshape(B, 2 * T, C)


# --------------------------------------------------------------------------
# Forward orchestration
# --------------------------------------------------------------------------
def sinusoidal_pos_emb(t, dim):
    half = dim // 2
    scale = math.log(10000.0) / (half - 1)
    freqs = jnp.exp(-scale * jnp.arange(half, dtype=F32))
    arg = t.astype(F32)[:, None] * freqs[None, :]
    return jnp.concatenate([jnp.sin(arg), jnp.cos(arg)], axis=-1)


def conditional_unet1d_forward(params, sample, timestep, global_cond=None, *, dsed):
    """sample: (B, T, input_dim); timestep: scalar or (B,); global_cond: (B, Gc)."""
    B, T, Din = sample.shape
    t = jnp.broadcast_to(jnp.atleast_1d(jnp.asarray(timestep, F32)), (B,))

    # diffusion_step_encoder: SinusoidalPosEmb -> Linear -> Mish -> Linear
    emb = sinusoidal_pos_emb(t, dsed)
    gf = pallas_linear(emb, params["dse_w1"], params["dse_b1"], mish_out=True)
    gf = pallas_linear(gf, params["dse_w2"], params["dse_b2"])
    if global_cond is not None:
        gf = jnp.concatenate([gf, global_cond.astype(F32)], axis=-1)

    # All per-block FiLM embeddings (Mish -> Linear) in ONE stacked matmul.
    all_embed = pallas_linear(gf, params["cond_all_w"], params["cond_all_b"],
                              mish_in=True)                       # (B, sum Cout)

    def crb(p, x):
        e = all_embed[:, p["cond_off"]:p["cond_off"] + p["cout"]]
        out = conv_block(x, p["block0"], cond_add=e)
        out = conv_block(out, p["block1"], res_x=x,
                         res_w=p.get("res_w"), res_b=p.get("res_b"))
        return out

    # TODO(synk): local_cond path (local_cond_encoder) not implemented; module's
    # default construction uses local_cond_dim=None.

    x = sample.astype(F32)
    h = []
    for lvl in params["down"]:
        x = crb(lvl["res1"], x)
        x = crb(lvl["res2"], x)
        h.append(x)
        if "down" in lvl:
            x = downsample1d(lvl["down"], x)

    for m in params["mid"]:
        x = crb(m, x)

    for lvl in params["up"]:
        x = jnp.concatenate([x, h.pop()], axis=-1)
        x = crb(lvl["res1"], x)
        x = crb(lvl["res2"], x)
        if "up" in lvl:
            x = upsample1d(lvl["up"], x)

    # final_conv: Conv1dBlock(start,start,3) + Conv1d(start,input_dim,1), fused.
    x = conv_block(x, params["final_block"],
                   post_w=params["final_w"], post_b=params["final_b"])
    return x


# --------------------------------------------------------------------------
# Deterministic synthetic parameters
# --------------------------------------------------------------------------
def _group_mats(c, g):
    cg = c // g
    ids = jnp.arange(c) // cg
    scat = (ids[:, None] == jnp.arange(g)[None, :]).astype(F32) / float(cg)  # (C, G)
    gath = (jnp.arange(g)[:, None] == ids[None, :]).astype(F32)              # (G, C)
    return scat, gath


class _KeyGen:
    def __init__(self, key):
        self._key, self._i = key, 0

    def __call__(self):
        self._i += 1
        return jax.random.fold_in(self._key, self._i)


def _init_conv_block(kg, cin, cout, K, ng):
    scale = 1.0 / math.sqrt(K * cin)
    scat, gath = _group_mats(cout, ng)
    return dict(
        w=(scale * jax.random.normal(kg(), (K, cin, cout), F32)).astype(BF16),
        b=0.02 * jax.random.normal(kg(), (cout,), F32),
        g=1.0 + 0.02 * jax.random.normal(kg(), (cout,), F32),
        beta=0.02 * jax.random.normal(kg(), (cout,), F32),
        scat=scat, gath=gath)


def _init_crb(kg, cin, cout, cond_dim, K, ng):
    p = dict(
        block0=_init_conv_block(kg, cin, cout, K, ng),
        block1=_init_conv_block(kg, cout, cout, K, ng),
        cond_w=(1.0 / math.sqrt(cond_dim)) * jax.random.normal(kg(), (cond_dim, cout), F32),
        cond_b=0.02 * jax.random.normal(kg(), (cout,), F32))
    if cin != cout:
        p["res_w"] = ((1.0 / math.sqrt(cin))
                      * jax.random.normal(kg(), (cin, cout), F32)).astype(BF16)
        p["res_b"] = 0.02 * jax.random.normal(kg(), (cout,), F32)
    return p


def init_conditional_unet1d(key, input_dim, global_cond_dim, dsed, down_dims, K, ng):
    kg = _KeyGen(key)
    all_dims = [input_dim] + list(down_dims)
    start_dim = down_dims[0]
    cond_dim = dsed + (global_cond_dim or 0)
    in_out = list(zip(all_dims[:-1], all_dims[1:]))

    p = {}
    p["dse_w1"] = (1.0 / math.sqrt(dsed)) * jax.random.normal(kg(), (dsed, dsed * 4), F32)
    p["dse_b1"] = 0.02 * jax.random.normal(kg(), (dsed * 4,), F32)
    p["dse_w2"] = (1.0 / math.sqrt(dsed * 4)) * jax.random.normal(kg(), (dsed * 4, dsed), F32)
    p["dse_b2"] = 0.02 * jax.random.normal(kg(), (dsed,), F32)

    down = []
    for ind, (din, dout) in enumerate(in_out):
        is_last = ind >= len(in_out) - 1
        lvl = dict(res1=_init_crb(kg, din, dout, cond_dim, K, ng),
                   res2=_init_crb(kg, dout, dout, cond_dim, K, ng))
        if not is_last:
            lvl["down"] = dict(
                w=((1.0 / math.sqrt(3 * dout))
                   * jax.random.normal(kg(), (3, dout, dout), F32)).astype(BF16),
                b=0.02 * jax.random.normal(kg(), (dout,), F32))
        down.append(lvl)
    p["down"] = down

    mid_dim = all_dims[-1]
    p["mid"] = [_init_crb(kg, mid_dim, mid_dim, cond_dim, K, ng) for _ in range(2)]

    up = []
    for ind, (din, dout) in enumerate(reversed(in_out[1:])):
        is_last = ind >= len(in_out) - 1
        lvl = dict(res1=_init_crb(kg, dout * 2, din, cond_dim, K, ng),
                   res2=_init_crb(kg, din, din, cond_dim, K, ng))
        if not is_last:
            lvl["up"] = dict(
                w=((1.0 / math.sqrt(4 * din))
                   * jax.random.normal(kg(), (4, din, din), F32)).astype(BF16),
                b=0.02 * jax.random.normal(kg(), (din,), F32))
        up.append(lvl)
    p["up"] = up

    p["final_block"] = _init_conv_block(kg, start_dim, start_dim, K, 8)  # default n_groups=8
    p["final_w"] = ((1.0 / math.sqrt(start_dim))
                    * jax.random.normal(kg(), (start_dim, input_dim), F32)).astype(BF16)
    p["final_b"] = 0.02 * jax.random.normal(kg(), (input_dim,), F32)

    # Stack every residual block's FiLM cond weights (forward order) into one matmul.
    order = []
    for lvl in p["down"]:
        order += [lvl["res1"], lvl["res2"]]
    order += list(p["mid"])
    for lvl in p["up"]:
        order += [lvl["res1"], lvl["res2"]]
    ws, bs, off = [], [], 0
    for blk in order:
        cout = blk["block0"]["w"].shape[-1]
        blk["cond_off"] = off
        blk["cout"] = cout
        ws.append(blk.pop("cond_w"))
        bs.append(blk.pop("cond_b"))
        off += cout
    p["cond_all_w"] = jnp.concatenate(ws, axis=1)
    p["cond_all_b"] = jnp.concatenate(bs, axis=0)
    return p


# --------------------------------------------------------------------------
if __name__ == "__main__":
    key = jax.random.PRNGKey(0)

    # small but structurally faithful config
    B, T = 2, 16
    INPUT_DIM = 4
    GLOBAL_COND_DIM = 8
    DSED = 16
    DOWN_DIMS = [8, 16]
    KSIZE = 3
    NGROUPS = 4

    params = init_conditional_unet1d(key, INPUT_DIM, GLOBAL_COND_DIM, DSED,
                                     DOWN_DIMS, KSIZE, NGROUPS)

    kx, kc = jax.random.split(jax.random.fold_in(key, 12345))
    sample = jax.random.normal(kx, (B, T, INPUT_DIM), F32)        # (B, T, input_dim)
    global_cond = jax.random.normal(kc, (B, GLOBAL_COND_DIM), F32)
    timestep = 10

    out = conditional_unet1d_forward(params, sample, timestep, global_cond, dsed=DSED)
    out = jax.block_until_ready(out)

    assert out.shape == (B, T, INPUT_DIM), out.shape
    assert bool(jnp.all(jnp.isfinite(out)))
    print("KERNEL_OK")
</pallas_src>

<mosaic_0001>
module attributes {stable_mosaic.version = 11 : i64} {
  func.func @_linear_kernel(%arg0: memref<2x16xf32, #tpu.memory_space<vmem>>, %arg1: memref<16x64xf32, #tpu.memory_space<vmem>>, %arg2: memref<1x64xf32, #tpu.memory_space<vmem>>, %arg3: memref<2x64xf32, #tpu.memory_space<vmem>>) attributes {dimension_semantics = [], scalar_prefetch = 0 : i64, scratch_operands = 0 : i64, tpu.core_type = #tpu.core_type<tc>} {
    %c0 = arith.constant 0 : index
    %c0_0 = arith.constant 0 : index
    %0 = vector.load %arg0[%c0, %c0_0] : memref<2x16xf32, #tpu.memory_space<vmem>>, vector<2x16xf32>
    %c0_1 = arith.constant 0 : index
    %c0_2 = arith.constant 0 : index
    %1 = vector.load %arg1[%c0_1, %c0_2] : memref<16x64xf32, #tpu.memory_space<vmem>>, vector<16x64xf32>
    %cst = arith.constant dense<0.000000e+00> : vector<2x64xf32>
    %2 = tpu.matmul %0, %1, %cst {dimension_numbers = #tpu.dot_dimension_numbers<[1], [0], [0], [1], [0, 0, 1, 1], [], []>} : vector<2x16xf32>, vector<16x64xf32>, vector<2x64xf32> -> vector<2x64xf32>
    %c0_3 = arith.constant 0 : index
    %c0_4 = arith.constant 0 : index
    %3 = vector.load %arg2[%c0_3, %c0_4] : memref<1x64xf32, #tpu.memory_space<vmem>>, vector<1x64xf32>
    %4 = vector.broadcast %3 : vector<1x64xf32> to vector<2x64xf32>
    %5 = arith.addf %2, %4 : vector<2x64xf32>
    %cst_5 = arith.constant 0.000000e+00 : f32
    %6 = vector.broadcast %cst_5 : f32 to vector<2x64xf32>
    %7 = arith.maximumf %5, %6 : vector<2x64xf32>
    %8 = vector.broadcast %cst_5 : f32 to vector<2x64xf32>
    %9 = arith.subf %5, %8 : vector<2x64xf32>
    %10 = arith.cmpf one, %9, %9 : vector<2x64xf32>
    %11 = vector.broadcast %cst_5 : f32 to vector<2x64xf32>
    %12 = arith.addf %5, %11 : vector<2x64xf32>
    %13 = math.absf %9 : vector<2x64xf32>
    %cst_6 = arith.constant 0.000000e+00 : f32
    %14 = vector.broadcast %cst_6 : f32 to vector<2x64xf32>
    %15 = arith.subf %14, %13 : vector<2x64xf32>
    %16 = math.exp %15 : vector<2x64xf32>
    %17 = math.log1p %16 : vector<2x64xf32>
    %18 = arith.addf %7, %17 : vector<2x64xf32>
    %19 = arith.select %10, %12, %18 : vector<2x64xi1>, vector<2x64xf32>
    %20 = math.tanh %19 : vector<2x64xf32>
    %21 = arith.mulf %5, %20 : vector<2x64xf32>
    %c0_7 = arith.constant 0 : index
    %c0_8 = arith.constant 0 : index
    %22 = vector.load %arg3[%c0_7, %c0_8] : memref<2x64xf32, #tpu.memory_space<vmem>>, vector<2x64xf32>
    tpu.vector_store %arg3[%c0_7, %c0_8], %21 {strides = array<i32>} : memref<2x64xf32, #tpu.memory_space<vmem>>, vector<2x64xf32>,
    return
  }
}

</mosaic_0001>

<llo_original>
// kernel: tpu_custom_call.1
$region0: #{tpu_custom_call.1}
  #allocation0 [shape = 'u32[]', space=smem, size = 0x4, offset = 0x4, fixed_abs, tag = 'smem constant byte address 0x4 - core index']
  #allocation1 [shape = 'u32[144,128]{1,0:T(1,128)}', space=vmem, size = 0x12000, scoped, tag = 'internal scratch']
  %s0 = inlined_call_operand.hbm [shape: f32[2,16], index: 0, kind: input, shape index: {}]
  %s1 = inlined_call_operand.hbm [shape: f32[16,64], index: 1, kind: input, shape index: {}]
  %s2 = inlined_call_operand.vmem [shape: f32[1,64], index: 2, kind: input, shape index: {}]
  %s3 = inlined_call_operand.hbm [shape: f32[2,64], index: 3, kind: output, shape index: {}]
  %s4 = sld [smem:[#allocation0]]
  $region30: #{tpu_custom_call.1} parent=0
    _
  %s6 = ssub.s32 1, %s4
  %s7 = scalar_select 0, %s6, %s4
  $region1: #{tpu_custom_call.1} parent=0
    #allocation2 [shape = 'u8[1024]{0}', space=vmem, size = 0x400, scoped, tag = 'input window, operand 0, single buffered']
    #allocation3 [shape = 's32[1]{0}', space=sflag, size = 0x4, scoped, tag = 'scoped memory for tpu_custom_call.1']
    #allocation4 [shape = 's32[1]{0}', space=sflag, size = 0x4, scoped, tag = 'scoped memory for tpu_custom_call.1']
    #allocation5 [shape = 'u8[8192]{0}', space=vmem, size = 0x2000, scoped, tag = 'input window, operand 1, single buffered']
    #allocation6 [shape = 's32[1]{0}', space=sflag, size = 0x4, scoped, tag = 'scoped memory for tpu_custom_call.1']
    #allocation7 [shape = 'u8[1024]{0}', space=vmem, size = 0x400, scoped, tag = 'output window, operand 0, single buffered']
    %8 = vsyncpa [#allocation3], 0
    %9 = vsyncpa [#allocation6], 0
    %10 = vsyncpa [#allocation4], 0
    // Predicated region
    $region2: #{tpu_custom_call.1} parent=1 // pred_check
      _
    $region3: #{tpu_custom_call.1} parent=1 // pred_check_branch
      %12 = sbr.rel (0) target = $region5
    $region4: #{tpu_custom_call.1} parent=1 // pred_region
      %s14 = ssub.s32 32, 32
      %15 = vsyncadd [#allocation3], %s14
      %s17 = sshll.u32 [#allocation2], 4
      %s18 = int_to_ptr.vmem [resolvable:$true] %s17
      %20 = dma.hbm_to_vmem [thread:$0]  %s0, 32, %s18, [#allocation3]
    $region5: #{tpu_custom_call.1} parent=1 // pred_fallthru
      _
    // Predicated region
    $region6: #{tpu_custom_call.1} parent=1 // pred_check
      _
    $region7: #{tpu_custom_call.1} parent=1 // pred_check_branch
      %22 = sbr.rel (0) target = $region9
    $region8: #{tpu_custom_call.1} parent=1 // pred_region
      %s24 = ssub.s32 256, 256
      %25 = vsyncadd [#allocation6], %s24
      %s26 = sshll.u32 [#allocation5], 4
      %s27 = int_to_ptr.vmem [resolvable:$true] %s26
      %32 = dma.hbm_to_vmem [thread:$0]  %s1, 256, %s27, [#allocation6], 128, 128, 8
    $region9: #{tpu_custom_call.1} parent=1 // pred_fallthru
      _
    // Predicated region
    $region10: #{tpu_custom_call.1} parent=1 // pred_check
      _
    $region11: #{tpu_custom_call.1} parent=1 // pred_check_branch
      %34 = sbr.rel (0) target = $region13
    $region12: #{tpu_custom_call.1} parent=1 // pred_region
      _
    $region13: #{tpu_custom_call.1} parent=1 // pred_fallthru
      _
    // Predicated region
    $region14: #{tpu_custom_call.1} parent=1 // pred_check
      _
    $region15: #{tpu_custom_call.1} parent=1 // pred_check_branch
      %36 = sbr.rel (0) target = $region17
    $region16: #{tpu_custom_call.1} parent=1 // pred_region
      %37 = dma.done [#allocation3], 32
    $region17: #{tpu_custom_call.1} parent=1 // pred_fallthru
      _
    // Predicated region
    $region18: #{tpu_custom_call.1} parent=1 // pred_check
      _
    $region19: #{tpu_custom_call.1} parent=1 // pred_check_branch
      %39 = sbr.rel (0) target = $region21
    $region20: #{tpu_custom_call.1} parent=1 // pred_region
      %40 = dma.done [#allocation6], 256
    $region21: #{tpu_custom_call.1} parent=1 // pred_fallthru
      _
    %v41 = vld [vmem:[#allocation2] sm:$0x3]
    %v42 = vld [vmem:[#allocation5] sm:$0xff]
    %v43 = vld [vmem:[#allocation5 + $0x8] sm:$0xff]
    %v44 = vld [vmem:[%s2] sm:$0x1]
    %v46 = vlaneseq
    %v47 = vshrl.u32 %v46, 7
    %v48 = vsub.s32 0, %v47
    %v49 = vrot.slane %v44, %v48
    %vm51 = vcmask 130048
    %v53 = vsel %vm51, %v41, 0
    %55 = vmatprep.subr.mxu0 0.0
    %56 = vmatpush1.msra.mxu0 %v42
    %57 = vmatprep.subr.mxu0 0.0
    %58 = vmatpush1.msra.mxu0 %v43
    %59 = vmatprep.subr.mxu0 0.0
    %60 = vmatpush1.msra.mxu0 0.0
    %61 = vmatprep.subr.mxu0 0.0
    %62 = vmatpush1.msra.mxu0 0.0
    %63 = vmatprep.subr.mxu0 0.0
    %64 = vmatpush1.msra.mxu0 0.0
    %65 = vmatprep.subr.mxu0 0.0
    %66 = vmatpush1.msra.mxu0 0.0
    %67 = vmatprep.subr.mxu0 0.0
    %68 = vmatpush1.msra.mxu0 0.0
    %69 = vmatprep.subr.mxu0 0.0
    %70 = vmatpush1.msra.mxu0 0.0
    %71 = vmatprep.subr.mxu0 0.0
    %72 = vmatpush1.msra.mxu0 0.0
    %73 = vmatprep.subr.mxu0 0.0
    %74 = vmatpush1.msra.mxu0 0.0
    %75 = vmatprep.subr.mxu0 0.0
    %76 = vmatpush1.msra.mxu0 0.0
    %77 = vmatprep.subr.mxu0 0.0
    %78 = vmatpush1.msra.mxu0 0.0
    %79 = vmatprep.subr.mxu0 0.0
    %80 = vmatpush1.msra.mxu0 0.0
    %81 = vmatprep.subr.mxu0 0.0
    %82 = vmatpush1.msra.mxu0 0.0
    %83 = vmatprep.subr.mxu0 0.0
    %84 = vmatpush1.msra.mxu0 0.0
    %85 = vmatprep.subr.mxu0 0.0
    %86 = vmatpush1.msra.mxu0 0.0
    %87 = vmatprep.subr.mxu0 0.0
    %88 = vmatpush1.msra.mxu0 0.0
    %89 = vmatprep.subr.mxu0 0.0
    %90 = vmatpush1.msra.mxu0 0.0
    %91 = vmatprep.subr.mxu0 0.0
    %92 = vmatpush1.msra.mxu0 0.0
    %93 = vmatprep.subr.mxu0 0.0
    %94 = vmatpush1.msra.mxu0 0.0
    %95 = vmatprep.subr.mxu0 0.0
    %96 = vmatpush1.msra.mxu0 0.0
    %97 = vmatprep.subr.mxu0 0.0
    %98 = vmatpush1.msra.mxu0 0.0
    %99 = vmatprep.subr.mxu0 0.0
    %100 = vmatpush1.msra.mxu0 0.0
    %101 = vmatprep.subr.mxu0 0.0
    %102 = vmatpush1.msra.mxu0 0.0
    %103 = vmatprep.subr.mxu0 0.0
    %104 = vmatpush1.msra.mxu0 0.0
    %105 = vmatprep.subr.mxu0 0.0
    %106 = vmatpush1.msra.mxu0 0.0
    %107 = vmatprep.subr.mxu0 0.0
    %108 = vmatpush1.msra.mxu0 0.0
    %109 = vmatprep.subr.mxu0 0.0
    %110 = vmatpush1.msra.mxu0 0.0
    %111 = vmatprep.subr.mxu0 0.0
    %112 = vmatpush1.msra.mxu0 0.0
    %113 = vmatprep.subr.mxu0 0.0
    %114 = vmatpush1.msra.mxu0 0.0
    %115 = vmatprep.subr.mxu0 0.0
    %116 = vmatpush1.msra.mxu0 0.0
    %117 = vmatprep.subr.mxu0 0.0
    %118 = vmatpush1.msra.mxu0 0.0
    %119 = vmatprep.mubr.f32.mxu0 0.0
    %120 = vmatmul.mubr.f32.gmra.mrb[0].mxu0 %v53
    %v121 = vpop.f32.mrb[0].mxu0
    %v122 = vadd.f32 %v49, %v121
    %v123 = vpop.f32.mrb[0].mxu0
    %124 = vdwg.mxu0
    %v125 = vmax.f32 %v122, 0.0
    %vm126 = vcmp.ne.f32.partialorder %v122, %v122
    %v127 = vadd.f32 %v122, 0.0
    %v128 = vand.u32 2147483647, %v122
    %v129 = vsub.f32 0.0, %v128
    %v130 = vmul.f32 %v129, 1.442695
    %v131 = vpow.pop %v130
    %v132 = vadd.f32 %v131, 1.0
    %v133 = vlog2.pop %v132
    %v134 = vmul.f32 %v133, 0.6931472
    %v135 = vmul.f32 -0.5, %v131
    %v136 = vadd.f32 %v135, 1.0
    %v137 = vmul.f32 %v136, %v131
    %v138 = vand.u32 2147483647, %v131
    %vm139 = vcmp.lt.f32.partialorder %v138, 0.0004427343
    %v140 = vsel %vm139, %v137, %v134
    %v141 = vadd.f32 %v125, %v140
    %v142 = vsel %vm126, %v127, %v141
    %v143 = vtanh.pop %v142
    %v144 = vmul.f32 %v122, %v143
    %vm145 = vcmask 517120
    %146 = vst.msk [vmem:[#allocation7] sm:$0x3] %vm145, %v144
    // Predicated region
    $region22: #{tpu_custom_call.1} parent=1 // pred_check
      _
    $region23: #{tpu_custom_call.1} parent=1 // pred_check_branch
      %148 = sbr.rel (0) target = $region25
    $region24: #{tpu_custom_call.1} parent=1 // pred_region
      %s150 = ssub.s32 32, 32
      %151 = vsyncadd [#allocation4], %s150
      %s153 = sshll.u32 [#allocation7], 4
      %s154 = int_to_ptr.vmem [resolvable:$true] %s153
      %156 = dma.vmem_to_hbm [thread:$0]  %s154, 32, %s3, [#allocation4]
    $region25: #{tpu_custom_call.1} parent=1 // pred_fallthru
      _
    // Predicated region
    $region26: #{tpu_custom_call.1} parent=1 // pred_check
      _
    $region27: #{tpu_custom_call.1} parent=1 // pred_check_branch
      %158 = sbr.rel (0) target = $region29
    $region28: #{tpu_custom_call.1} parent=1 // pred_region
      %159 = dma.done [#allocation4], 32
    $region29: #{tpu_custom_call.1} parent=1 // pred_fallthru
      _
    %160 = vsyncpa [#allocation3], 1
    %161 = vsyncpa [#allocation6], 1
    %162 = vsyncpa [#allocation4], 1

</llo_original>
